<compile_context>
chip_gen: v7x
topology: tpu7x:2x2x1
jax: 0.10.0
libtpu: 0.0.40
codegen_flags: <defaults>
</compile_context>

<pallas_src>
import math
import functools

import jax
import jax.numpy as jnp
from jax import lax
from jax.experimental import pallas as pl
from jax.experimental.pallas import tpu as pltpu


def _attn_kernel(*refs, with_mask: bool, with_p: bool, use_bf16_matmul: bool):
    idx = 0
    mask_ref = None
    if with_mask:
        mask_ref = refs[idx]
        idx += 1
    q_ref, k_ref, v_ref = refs[idx], refs[idx + 1], refs[idx + 2]
    idx += 3
    o_ref = refs[idx]
    idx += 1
    p_ref = refs[idx] if with_p else None

    q = q_ref[0]  # (TQ, D)
    k = k_ref[0]  # (Sk, D)
    v = v_ref[0]  # (Sk, D)

    d_k = k.shape[-1]
    scale = 1.0 / math.sqrt(d_k)
    qs = q * scale  # fold the scale into q: TQ*D multiplies instead of TQ*Sk

    if use_bf16_matmul:
        qs = qs.astype(jnp.bfloat16)
        k = k.astype(jnp.bfloat16)

    # Contract the D axes directly (no k.T layout copy); accumulate in f32 on the MXU.
    scores = lax.dot_general(
        qs, k,
        dimension_numbers=(((1,), (1,)), ((), ())),
        preferred_element_type=jnp.float32,
    )  # (TQ, Sk) f32

    if with_mask:
        mask = mask_ref[0]  # (TQ, Sk) f32
        scores = jnp.where(mask == 0, jnp.float32(-1e9), scores)

    # softmax_one: exp(x - max) / (1 + sum(exp(x - max)))  -- epilogue kept in f32.
    m = jnp.max(scores, axis=-1, keepdims=True)
    e = jnp.exp(scores - m)
    denom = 1.0 + jnp.sum(e, axis=-1, keepdims=True)            # (TQ, 1)
    p = e * pl.reciprocal(denom)                                 # recip + mul, no big divide

    if with_p:
        p_ref[0] = p.astype(p_ref.dtype)

    if use_bf16_matmul:
        pv = p.astype(jnp.bfloat16)
        vv = v.astype(jnp.bfloat16)
    else:
        pv = p.astype(v.dtype)
        vv = v
    o = lax.dot_general(
        pv, vv,
        dimension_numbers=(((1,), (0,)), ((), ())),
        preferred_element_type=jnp.float32,
    )  # (TQ, D) f32
    o_ref[0] = o.astype(o_ref.dtype)


def _choose_q_tile(s: int) -> int:
    """Pick a query tile that is a multiple of 8, ~256 rows, and divides S."""
    if s <= 256:
        return s
    for cand in (256, 512, 128, 64, 32, 16, 8):
        if s % cand == 0:
            return cand
    return s  # odd S: fall back to one full-S tile


@functools.partial(
    jax.jit, static_argnames=("dropout", "return_p_attn", "use_bf16_matmul")
)
def scaled_dot_product_attention(q, k, v, mask=None, dropout=0.0,
                                 return_p_attn=True, use_bf16_matmul=False):
    """Forward pass of ScaledDotProductAttention (softmax_one variant).

    Returns (output, p_attn) when return_p_attn=True (module semantics), else
    just the output (skips the S x Sk p_attn HBM writeback entirely).
    """
    if dropout:
        # TODO(synk): train-mode dropout (Bernoulli masking of p_attn) not implemented.
        raise NotImplementedError("dropout > 0.0 is not supported in this kernel")

    *batch_dims, S, D = q.shape
    batch_dims = tuple(batch_dims)
    Sk = k.shape[-2]
    BH = 1
    for b in batch_dims:
        BH *= b

    q3 = q.reshape(BH, S, D)
    k3 = k.reshape(BH, Sk, D)
    v3 = v.reshape(BH, Sk, D)

    TQ = _choose_q_tile(S)
    NQ = S // TQ
    grid = (BH, NQ)

    in_specs = [
        pl.BlockSpec((1, TQ, D), lambda b, qi: (b, qi, 0)),   # q: query-tiled
        pl.BlockSpec((1, Sk, D), lambda b, qi: (b, 0, 0)),    # k: resident across q tiles
        pl.BlockSpec((1, Sk, D), lambda b, qi: (b, 0, 0)),    # v: resident across q tiles
    ]
    inputs = [q3, k3, v3]

    with_mask = mask is not None
    if with_mask:
        mask_f = jnp.asarray(mask).astype(jnp.float32)
        lead = mask_f.shape[:-2]
        per_head = any(d != 1 for d in lead)
        if per_head:
            # Mask genuinely differs per batch/head: one block per head.
            mask3 = jnp.broadcast_to(mask_f, batch_dims + (S, Sk)).reshape(BH, S, Sk)
            mask_map = lambda b, qi: (b, qi, 0)
        else:
            # Shared mask: keep a single copy and reuse it for every head
            # (index_map ignores the batch-head grid index -> no per-head DMA).
            mask2 = mask_f.reshape(mask_f.shape[-2], mask_f.shape[-1])
            mask3 = jnp.broadcast_to(mask2, (S, Sk)).reshape(1, S, Sk)
            mask_map = lambda b, qi: (0, qi, 0)
        in_specs = [pl.BlockSpec((1, TQ, Sk), mask_map)] + in_specs
        inputs = [mask3] + inputs

    if return_p_attn:
        out_shape = (
            jax.ShapeDtypeStruct((BH, S, D), q.dtype),
            jax.ShapeDtypeStruct((BH, S, Sk), q.dtype),
        )
        out_specs = (
            pl.BlockSpec((1, TQ, D), lambda b, qi: (b, qi, 0)),
            pl.BlockSpec((1, TQ, Sk), lambda b, qi: (b, qi, 0)),
        )
    else:
        out_shape = jax.ShapeDtypeStruct((BH, S, D), q.dtype)
        out_specs = pl.BlockSpec((1, TQ, D), lambda b, qi: (b, qi, 0))

    kernel = functools.partial(
        _attn_kernel,
        with_mask=with_mask,
        with_p=return_p_attn,
        use_bf16_matmul=use_bf16_matmul,
    )

    result = pl.pallas_call(
        kernel,
        out_shape=out_shape,
        grid=grid,
        in_specs=in_specs,
        out_specs=out_specs,
        compiler_params=pltpu.CompilerParams(
            dimension_semantics=("parallel", "parallel")
        ),
    )(*inputs)

    if return_p_attn:
        out3, p3 = result
        out = out3.reshape(batch_dims + (S, D))
        p_attn = p3.reshape(batch_dims + (S, Sk))
        return out, p_attn
    return result.reshape(batch_dims + (S, D))


def _reference(q, k, v, mask=None):
    d_k = k.shape[-1]
    scores = jnp.einsum("...qd,...kd->...qk", q, k) / math.sqrt(d_k)
    if mask is not None:
        scores = jnp.where(mask == 0, -1e9, scores)
    m = jnp.max(scores, axis=-1, keepdims=True)
    e = jnp.exp(scores - m)
    p = e / (1.0 + jnp.sum(e, axis=-1, keepdims=True))
    return jnp.einsum("...qk,...kd->...qd", p, v), p


if __name__ == "__main__":
    key = jax.random.PRNGKey(0)
    kq, kk, kv = jax.random.split(key, 3)
    B, H, S, D = 2, 2, 8, 32
    q = jax.random.normal(kq, (B, H, S, D), dtype=jnp.float32)
    k = jax.random.normal(kk, (B, H, S, D), dtype=jnp.float32)
    v = jax.random.normal(kv, (B, H, S, D), dtype=jnp.float32)

    # Unmasked path.
    out, p_attn = scaled_dot_product_attention(q, k, v)
    jax.block_until_ready((out, p_attn))
    ref_out, ref_p = _reference(q, k, v)
    assert out.shape == (B, H, S, D) and p_attn.shape == (B, H, S, S)
    assert jnp.allclose(out, ref_out, atol=1e-5, rtol=1e-5)
    assert jnp.allclose(p_attn, ref_p, atol=1e-5, rtol=1e-5)

    # Masked path with a shared (1, 1, S, S) mask (single resident mask block).
    mask = jnp.tril(jnp.ones((S, S), dtype=jnp.int32)).reshape(1, 1, S, S)
    out_m, p_m = scaled_dot_product_attention(q, k, v, mask=mask)
    jax.block_until_ready((out_m, p_m))
    ref_out_m, ref_p_m = _reference(q, k, v, mask=mask)
    assert jnp.allclose(out_m, ref_out_m, atol=1e-5, rtol=1e-5)
    assert jnp.allclose(p_m, ref_p_m, atol=1e-5, rtol=1e-5)

    print("KERNEL_OK")
</pallas_src>

<mosaic_0001>
module attributes {stable_mosaic.version = 11 : i64} {
  func.func @_attn_kernel(%arg0: i32, %arg1: i32, %arg2: memref<1x8x32xf32, #tpu.memory_space<vmem>>, %arg3: memref<1x8x32xf32, #tpu.memory_space<vmem>>, %arg4: memref<1x8x32xf32, #tpu.memory_space<vmem>>, %arg5: memref<1x8x32xf32, #tpu.memory_space<vmem>>, %arg6: memref<1x8x8xf32, #tpu.memory_space<vmem>>) attributes {dimension_semantics = [#tpu.dimension_semantics<parallel>, #tpu.dimension_semantics<parallel>], iteration_bounds = array<i64: 4, 1>, scalar_prefetch = 0 : i64, scratch_operands = 0 : i64, tpu.core_type = #tpu.core_type<tc>, window_params = [{transform_indices = @transform_0, window_bounds = array<i64: 1, 8, 32>}, {transform_indices = @transform_1, window_bounds = array<i64: 1, 8, 32>}, {transform_indices = @transform_2, window_bounds = array<i64: 1, 8, 32>}, {transform_indices = @transform_3, window_bounds = array<i64: 1, 8, 32>}, {transform_indices = @transform_4, window_bounds = array<i64: 1, 8, 8>}]} {
    %c0 = arith.constant 0 : index
    %c0_0 = arith.constant 0 : index
    %c0_1 = arith.constant 0 : index
    %0 = vector.load %arg2[%c0, %c0_0, %c0_1] : memref<1x8x32xf32, #tpu.memory_space<vmem>>, vector<1x8x32xf32>
    %1 = vector.shape_cast %0 : vector<1x8x32xf32> to vector<8x32xf32>
    %c0_2 = arith.constant 0 : index
    %c0_3 = arith.constant 0 : index
    %c0_4 = arith.constant 0 : index
    %2 = vector.load %arg3[%c0_2, %c0_3, %c0_4] : memref<1x8x32xf32, #tpu.memory_space<vmem>>, vector<1x8x32xf32>
    %3 = vector.shape_cast %2 : vector<1x8x32xf32> to vector<8x32xf32>
    %c0_5 = arith.constant 0 : index
    %c0_6 = arith.constant 0 : index
    %c0_7 = arith.constant 0 : index
    %4 = vector.load %arg4[%c0_5, %c0_6, %c0_7] : memref<1x8x32xf32, #tpu.memory_space<vmem>>, vector<1x8x32xf32>
    %5 = vector.shape_cast %4 : vector<1x8x32xf32> to vector<8x32xf32>
    %cst = arith.constant 0.176776692 : f32
    %6 = vector.broadcast %cst : f32 to vector<8x32xf32>
    %7 = arith.mulf %1, %6 : vector<8x32xf32>
    %cst_8 = arith.constant dense<0.000000e+00> : vector<8x8xf32>
    %8 = tpu.matmul %7, %3, %cst_8 {dimension_numbers = #tpu.dot_dimension_numbers<[1], [1], [0], [0], [0, 0, 1, 0], [], []>} : vector<8x32xf32>, vector<8x32xf32>, vector<8x8xf32> -> vector<8x8xf32>
    %cst_9 = arith.constant dense<0xFF800000> : vector<8xf32>
    %9 = vector.multi_reduction <maximumf>, %8, %cst_9 [1] : vector<8x8xf32> to vector<8xf32>
    %10 = vector.shape_cast %9 : vector<8xf32> to vector<8x1xf32>
    %11 = vector.broadcast %10 : vector<8x1xf32> to vector<8x8xf32>
    %12 = arith.subf %8, %11 : vector<8x8xf32>
    %13 = math.exp %12 : vector<8x8xf32>
    %cst_10 = arith.constant dense<0.000000e+00> : vector<8xf32>
    %14 = vector.multi_reduction <add>, %13, %cst_10 [1] : vector<8x8xf32> to vector<8xf32>
    %15 = vector.shape_cast %14 : vector<8xf32> to vector<8x1xf32>
    %cst_11 = arith.constant 1.000000e+00 : f32
    %16 = vector.broadcast %cst_11 : f32 to vector<8x1xf32>
    %17 = arith.addf %16, %15 : vector<8x1xf32>
    %18 = tpu.reciprocal %17 : vector<8x1xf32> -> vector<8x1xf32>
    %19 = vector.broadcast %18 : vector<8x1xf32> to vector<8x8xf32>
    %20 = arith.mulf %13, %19 : vector<8x8xf32>
    %c0_12 = arith.constant 0 : index
    %c0_13 = arith.constant 0 : index
    %c0_14 = arith.constant 0 : index
    %21 = vector.load %arg6[%c0_12, %c0_13, %c0_14] : memref<1x8x8xf32, #tpu.memory_space<vmem>>, vector<1x8x8xf32>
    %22 = vector.shape_cast %21 : vector<1x8x8xf32> to vector<8x8xf32>
    %23 = vector.shape_cast %20 : vector<8x8xf32> to vector<1x8x8xf32>
    tpu.vector_store %arg6[%c0_12, %c0_13, %c0_14], %23 {strides = array<i32>} : memref<1x8x8xf32, #tpu.memory_space<vmem>>, vector<1x8x8xf32>,
    %cst_15 = arith.constant dense<0.000000e+00> : vector<8x32xf32>
    %24 = tpu.matmul %20, %5, %cst_15 {dimension_numbers = #tpu.dot_dimension_numbers<[1], [0], [0], [1], [0, 0, 1, 1], [], []>} : vector<8x8xf32>, vector<8x32xf32>, vector<8x32xf32> -> vector<8x32xf32>
    %c0_16 = arith.constant 0 : index
    %c0_17 = arith.constant 0 : index
    %c0_18 = arith.constant 0 : index
    %25 = vector.load %arg5[%c0_16, %c0_17, %c0_18] : memref<1x8x32xf32, #tpu.memory_space<vmem>>, vector<1x8x32xf32>
    %26 = vector.shape_cast %25 : vector<1x8x32xf32> to vector<8x32xf32>
    %27 = vector.shape_cast %24 : vector<8x32xf32> to vector<1x8x32xf32>
    tpu.vector_store %arg5[%c0_16, %c0_17, %c0_18], %27 {strides = array<i32>} : memref<1x8x32xf32, #tpu.memory_space<vmem>>, vector<1x8x32xf32>,
    return
  }
  func.func @transform_0(%arg0: i32, %arg1: i32) -> (i32, i32, i32) {
    %c0_i32 = arith.constant 0 : i32
    %c0_i32_0 = arith.constant 0 : i32
    return %arg0, %arg1, %c0_i32 : i32, i32, i32
  }
  func.func @transform_1(%arg0: i32, %arg1: i32) -> (i32, i32, i32) {
    %c0_i32 = arith.constant 0 : i32
    %c0_i32_0 = arith.constant 0 : i32
    %c0_i32_1 = arith.constant 0 : i32
    return %arg0, %c0_i32, %c0_i32_0 : i32, i32, i32
  }
  func.func @transform_2(%arg0: i32, %arg1: i32) -> (i32, i32, i32) {
    %c0_i32 = arith.constant 0 : i32
    %c0_i32_0 = arith.constant 0 : i32
    %c0_i32_1 = arith.constant 0 : i32
    return %arg0, %c0_i32, %c0_i32_0 : i32, i32, i32
  }
  func.func @transform_3(%arg0: i32, %arg1: i32) -> (i32, i32, i32) {
    %c0_i32 = arith.constant 0 : i32
    %c0_i32_0 = arith.constant 0 : i32
    return %arg0, %arg1, %c0_i32 : i32, i32, i32
  }
  func.func @transform_4(%arg0: i32, %arg1: i32) -> (i32, i32, i32) {
    %c0_i32 = arith.constant 0 : i32
    %c0_i32_0 = arith.constant 0 : i32
    return %arg0, %arg1, %c0_i32 : i32, i32, i32
  }
}

</mosaic_0001>

<llo_original>
// kernel: scaled_dot_product_attention.1
$region0: #{scaled_dot_product_attention.1}
  #allocation0 [shape = 'u32[]', space=smem, size = 0x4, offset = 0x4, fixed_abs, tag = 'smem constant byte address 0x4 - core index']
  #allocation1 [shape = 'u32[144,128]{1,0:T(1,128)}', space=vmem, size = 0x12000, scoped, tag = 'internal scratch']
  %s0 = inlined_call_operand.hbm [shape: f32[4,8,32], index: 0, kind: input, shape index: {}]
  %s1 = inlined_call_operand.hbm [shape: f32[4,8,32], index: 1, kind: input, shape index: {}]
  %s2 = inlined_call_operand.hbm [shape: f32[4,8,32], index: 2, kind: input, shape index: {}]
  %s3 = inlined_call_operand.hbm [shape: f32[4,8,32], index: 3, kind: output, shape index: {0}]
  %s4 = inlined_call_operand.hbm [shape: f32[4,8,8], index: 4, kind: output, shape index: {1}]
  %5 = xla_tuple %s3, %s4
  %s6 = sld [smem:[#allocation0]]
  $region65: #{scaled_dot_product_attention.1} parent=0
    _
  %s8 = ssub.s32 1, %s6
  %s9 = scalar_select 0, %s8, %s6
  $region1: #{scaled_dot_product_attention.1} parent=0
    #allocation2 [shape = 'u8[8192]{0}', space=vmem, size = 0x2000, scoped, tag = 'input window, operand 0']
    #allocation3 [shape = 's32[2]{0}', space=sflag, size = 0x8, scoped, tag = 'scoped memory for scaled_dot_product_attention.1']
    #allocation4 [shape = 's32[2]{0}', space=sflag, size = 0x8, scoped, tag = 'scoped memory for scaled_dot_product_attention.1']
    #allocation5 [shape = 'u8[8192]{0}', space=vmem, size = 0x2000, scoped, tag = 'input window, operand 1']
    #allocation6 [shape = 's32[2]{0}', space=sflag, size = 0x8, scoped, tag = 'scoped memory for scaled_dot_product_attention.1']
    #allocation7 [shape = 'u8[8192]{0}', space=vmem, size = 0x2000, scoped, tag = 'input window, operand 2']
    #allocation8 [shape = 'u8[8192]{0}', space=vmem, size = 0x2000, scoped, tag = 'output window, operand 0']
    #allocation9 [shape = 'u8[8192]{0}', space=vmem, size = 0x2000, scoped, tag = 'output window, operand 1']
    #allocation10 [shape = 's32[2]{0}', space=sflag, size = 0x8, scoped, tag = 'scoped memory for scaled_dot_product_attention.1']
    %10 = vsyncpa [#allocation3], 0
    %s11 = scalar_lea.sflag [#allocation3], 1
    %12 = vsyncpa %s11, 0
    %13 = vsyncpa [#allocation6], 0
    %s14 = scalar_lea.sflag [#allocation6], 1
    %15 = vsyncpa %s14, 0
    %16 = vsyncpa [#allocation4], 0
    %s17 = scalar_lea.sflag [#allocation4], 1
    %18 = vsyncpa %s17, 0
    %19 = vsyncpa [#allocation10], 0
    %s20 = scalar_lea.sflag [#allocation10], 1
    %21 = vsyncpa %s20, 0
    loop: start=0, step=1, limit=6
    $region2: #{scaled_dot_product_attention.1} parent=1 // loop_pre_header
      _
    $region3: #{scaled_dot_product_attention.1} parent=1 // loop_header
      %s23 = sphi 0, %s27
      %p24 = scmp.ge.s32.totalorder %s23, 6
      %s30 = sphi 0, %s42
      %s31 = sphi 0, %s38
      %s32 = sphi 0, %s30
      %s33 = sphi 0, %s31
      %s34 = sphi 0, %s32
      %s35 = sphi 0, %s33
      %s47 = sphi 0, %s49
      %s50 = sphi 0, %s47
      %s51 = sphi 0, %s50
      %s67 = sphi 0, %s51
      %s73 = sphi 0, %s75
      %s76 = sphi 0, %s73
      %s77 = sphi 0, %s76
      %s93 = sphi 0, %s77
      %s99 = sphi 0, %s101
      %s102 = sphi 0, %s99
      %s103 = sphi 0, %s102
      %s119 = sphi 0, %s103
      %s127 = sphi 0, %s129
      %s130 = sphi 0, %s127
      %s131 = sphi 0, %s130
      %s147 = sphi 0, %s131
      %s155 = sphi 0, %s157
      %s158 = sphi 0, %s155
      %s159 = sphi 0, %s158
      %s175 = sphi 0, %s159
    $region4: #{scaled_dot_product_attention.1} parent=1 // loop_header_branch
      %26 = sbr.rel (%p24) target = $region8
    $region5: #{scaled_dot_product_attention.1} parent=1 // loop_body
      %s28 = ssub.s32 %s23, 1
      %s29 = ssub.s32 %s23, 2
      %s36 = sadd.s32 1, %s31
      %p37 = scmp.ge.s32.totalorder %s36, 1
      %s38 = scalar_select %p37, 0, %s36
      %s39 = sadd.s32 1, %s30
      %s40 = scalar_select %p37, %s39, %s30
      %p41 = scmp.ge.s32.totalorder %s40, 4
      %s42 = scalar_select %p41, 0, %s40
      %s43 = ssub.s32 %s30, %s42
      %s44 = ssub.s32 %s31, %s38
      %s45 = sor.u32 %s43, %s44
      %p46 = scmp.eq.s32.totalorder %s45, 0
      %s48 = sadd.s32 %s47, 1
      %s49 = scalar_select %p46, %s47, %s48
      %p52 = pneg %p46
      %p53 = scmp.eq.s32.totalorder %s23, 3
      %p54 = por %p52, %p53
      %p55 = scmp.ne.s32.totalorder %s47, %s50
      %p56 = scmp.eq.s32.totalorder %s23, 0
      %p57 = por %p55, %p56
      %p58 = scmp.ne.s32.totalorder %s47, %s50
      %p59 = scmp.eq.s32.totalorder %s28, 3
      %p60 = por %p58, %p59
      %p61 = scmp.ne.s32.totalorder %s50, %s51
      %p62 = scmp.eq.s32.totalorder %s28, 0
      %p63 = por %p61, %p62
      %p64 = scmp.ne.s32.totalorder %s50, %s51
      %p65 = scmp.eq.s32.totalorder %s29, 3
      %p66 = por %p64, %p65
      %p68 = scmp.ne.s32.totalorder %s51, %s67
      %p69 = scmp.eq.s32.totalorder %s29, 0
      %p70 = por %p68, %p69
      %s71 = ssub.s32 %s30, %s42
      %p72 = scmp.eq.s32.totalorder %s71, 0
      %s74 = sadd.s32 %s73, 1
      %s75 = scalar_select %p72, %s73, %s74
      %p78 = pneg %p72
      %p79 = scmp.eq.s32.totalorder %s23, 3
      %p80 = por %p78, %p79
      %p81 = scmp.ne.s32.totalorder %s73, %s76
      %p82 = scmp.eq.s32.totalorder %s23, 0
      %p83 = por %p81, %p82
      %p84 = scmp.ne.s32.totalorder %s73, %s76
      %p85 = scmp.eq.s32.totalorder %s28, 3
      %p86 = por %p84, %p85
      %p87 = scmp.ne.s32.totalorder %s76, %s77
      %p88 = scmp.eq.s32.totalorder %s28, 0
      %p89 = por %p87, %p88
      %p90 = scmp.ne.s32.totalorder %s76, %s77
      %p91 = scmp.eq.s32.totalorder %s29, 3
      %p92 = por %p90, %p91
      %p94 = scmp.ne.s32.totalorder %s77, %s93
      %p95 = scmp.eq.s32.totalorder %s29, 0
      %p96 = por %p94, %p95
      %s97 = ssub.s32 %s30, %s42
      %p98 = scmp.eq.s32.totalorder %s97, 0
      %s100 = sadd.s32 %s99, 1
      %s101 = scalar_select %p98, %s99, %s100
      %p104 = pneg %p98
      %p105 = scmp.eq.s32.totalorder %s23, 3
      %p106 = por %p104, %p105
      %p107 = scmp.ne.s32.totalorder %s99, %s102
      %p108 = scmp.eq.s32.totalorder %s23, 0
      %p109 = por %p107, %p108
      %p110 = scmp.ne.s32.totalorder %s99, %s102
      %p111 = scmp.eq.s32.totalorder %s28, 3
      %p112 = por %p110, %p111
      %p113 = scmp.ne.s32.totalorder %s102, %s103
      %p114 = scmp.eq.s32.totalorder %s28, 0
      %p115 = por %p113, %p114
      %p116 = scmp.ne.s32.totalorder %s102, %s103
      %p117 = scmp.eq.s32.totalorder %s29, 3
      %p118 = por %p116, %p117
      %p120 = scmp.ne.s32.totalorder %s103, %s119
      %p121 = scmp.eq.s32.totalorder %s29, 0
      %p122 = por %p120, %p121
      %s123 = ssub.s32 %s30, %s42
      %s124 = ssub.s32 %s31, %s38
      %s125 = sor.u32 %s123, %s124
      %p126 = scmp.eq.s32.totalorder %s125, 0
      %s128 = sadd.s32 %s127, 1
      %s129 = scalar_select %p126, %s127, %s128
      %p132 = pneg %p126
      %p133 = scmp.eq.s32.totalorder %s23, 3
      %p134 = por %p132, %p133
      %p135 = scmp.ne.s32.totalorder %s127, %s130
      %p136 = scmp.eq.s32.totalorder %s23, 0
      %p137 = por %p135, %p136
      %p138 = scmp.ne.s32.totalorder %s127, %s130
      %p139 = scmp.eq.s32.totalorder %s28, 3
      %p140 = por %p138, %p139
      %p141 = scmp.ne.s32.totalorder %s130, %s131
      %p142 = scmp.eq.s32.totalorder %s28, 0
      %p143 = por %p141, %p142
      %p144 = scmp.ne.s32.totalorder %s130, %s131
      %p145 = scmp.eq.s32.totalorder %s29, 3
      %p146 = por %p144, %p145
      %p148 = scmp.ne.s32.totalorder %s131, %s147
      %p149 = scmp.eq.s32.totalorder %s29, 0
      %p150 = por %p148, %p149
      %s151 = ssub.s32 %s30, %s42
      %s152 = ssub.s32 %s31, %s38
      %s153 = sor.u32 %s151, %s152
      %p154 = scmp.eq.s32.totalorder %s153, 0
      %s156 = sadd.s32 %s155, 1
      %s157 = scalar_select %p154, %s155, %s156
      %p160 = pneg %p154
      %p161 = scmp.eq.s32.totalorder %s23, 3
      %p162 = por %p160, %p161
      %p163 = scmp.ne.s32.totalorder %s155, %s158
      %p164 = scmp.eq.s32.totalorder %s23, 0
      %p165 = por %p163, %p164
      %p166 = scmp.ne.s32.totalorder %s155, %s158
      %p167 = scmp.eq.s32.totalorder %s28, 3
      %p168 = por %p166, %p167
      %p169 = scmp.ne.s32.totalorder %s158, %s159
      %p170 = scmp.eq.s32.totalorder %s28, 0
      %p171 = por %p169, %p170
      %p172 = scmp.ne.s32.totalorder %s158, %s159
      %p173 = scmp.eq.s32.totalorder %s29, 3
      %p174 = por %p172, %p173
      %p176 = scmp.ne.s32.totalorder %s159, %s175
      %p177 = scmp.eq.s32.totalorder %s29, 0
      %p178 = por %p176, %p177
      %p179 = scmp.le.s32.totalorder 1, %s23
      %p180 = scmp.lt.s32.totalorder %s23, 5
      %p181 = pnand %p179, %p180
      %p182 = pneg %p181
      // Predicated region
      $region9: #{scaled_dot_product_attention.1} parent=5 // pred_check
        _
      $region10: #{scaled_dot_product_attention.1} parent=5 // pred_check_branch
        %184 = sbr.rel (%p181) target = $region12
      $region11: #{scaled_dot_product_attention.1} parent=5 // pred_region
        %s185 = ssub.s32 %s23, 1
      $region12: #{scaled_dot_product_attention.1} parent=5 // pred_fallthru
        _
      %p186 = scmp.lt.s32.totalorder %s23, 4
      // Predicated region
      $region13: #{scaled_dot_product_attention.1} parent=5 // pred_check
        %p187 = pneg %p186
      $region14: #{scaled_dot_product_attention.1} parent=5 // pred_check_branch
        %189 = sbr.rel (%p187) target = $region16
      $region15: #{scaled_dot_product_attention.1} parent=5 // pred_region
        // Predicated region
        $region17: #{scaled_dot_product_attention.1} parent=15 // pred_check
          %p190 = pneg %p57
        $region18: #{scaled_dot_product_attention.1} parent=15 // pred_check_branch
          %192 = sbr.rel (%p190) target = $region20
        $region19: #{scaled_dot_product_attention.1} parent=15 // pred_region
          %s193 = sand.u32 %s47, 1
          %s194 = scalar_lea.sflag [#allocation3], %s193
          %s195 = sand.u32 %s47, 1
          %s196 = smul.addr %s195, 8
          %s197 = scalar_lea.vmem [#allocation2], %s196
          %s199 = ssub.s32 128, 128
          %200 = vsyncadd %s194, %s199
          %s201 = sadd.s32 %s31, %s30
          %s202 = smul.addr %s201, 128
          %s203 = scalar_lea.hbm %s0, %s202
          %s205 = sshll.u32 %s197, 4
          %s206 = int_to_ptr.vmem [resolvable:$true] %s205
          %208 = dma.hbm_to_vmem [thread:$0]  %s203, 128, %s206, %s194
        $region20: #{scaled_dot_product_attention.1} parent=15 // pred_fallthru
          _
        // Predicated region
        $region21: #{scaled_dot_product_attention.1} parent=15 // pred_check
          %p209 = pneg %p83
        $region22: #{scaled_dot_product_attention.1} parent=15 // pred_check_branch
          %211 = sbr.rel (%p209) target = $region24
        $region23: #{scaled_dot_product_attention.1} parent=15 // pred_region
          %s212 = sand.u32 %s23, 1
          %s213 = scalar_lea.sflag [#allocation6], %s212
          %s214 = sand.u32 %s73, 1
          %s215 = smul.addr %s214, 8
          %s216 = scalar_lea.vmem [#allocation5], %s215
          %s218 = ssub.s32 128, 128
          %219 = vsyncadd %s213, %s218
          %s220 = smul.addr %s30, 128
          %s221 = scalar_lea.hbm %s1, %s220
          %s223 = sshll.u32 %s216, 4
          %s224 = int_to_ptr.vmem [resolvable:$true] %s223
          %226 = dma.hbm_to_vmem [thread:$0]  %s221, 128, %s224, %s213
        $region24: #{scaled_dot_product_attention.1} parent=15 // pred_fallthru
          _
        // Predicated region
        $region25: #{scaled_dot_product_attention.1} parent=15 // pred_check
          %p227 = pneg %p109
        $region26: #{scaled_dot_product_attention.1} parent=15 // pred_check_branch
          %229 = sbr.rel (%p227) target = $region28
        $region27: #{scaled_dot_product_attention.1} parent=15 // pred_region
          %s230 = sand.u32 %s23, 1
          %s231 = scalar_lea.sflag [#allocation6], %s230
          %s232 = sand.u32 %s99, 1
          %s233 = smul.addr %s232, 8
          %s234 = scalar_lea.vmem [#allocation7], %s233
          %s236 = ssub.s32 128, 128
          %237 = vsyncadd %s231, %s236
          %s238 = smul.addr %s30, 128
          %s239 = scalar_lea.hbm %s2, %s238
          %s241 = sshll.u32 %s234, 4
          %s242 = int_to_ptr.vmem [resolvable:$true] %s241
          %244 = dma.hbm_to_vmem [thread:$0]  %s239, 128, %s242, %s231
        $region28: #{scaled_dot_product_attention.1} parent=15 // pred_fallthru
          _
      $region16: #{scaled_dot_product_attention.1} parent=5 // pred_fallthru
        _
      %p245 = scmp.le.s32.totalorder 1, %s23
      %p246 = scmp.lt.s32.totalorder %s23, 5
      %p247 = pnand %p245, %p246
      %p248 = pneg %p247
      // Predicated region
      $region29: #{scaled_dot_product_attention.1} parent=5 // pred_check
        _
      $region30: #{scaled_dot_product_attention.1} parent=5 // pred_check_branch
        %250 = sbr.rel (%p247) target = $region32
      $region31: #{scaled_dot_product_attention.1} parent=5 // pred_region
        %s251 = ssub.s32 %s23, 1
        %s252 = sand.u32 %s50, 1
        %s253 = scalar_lea.sflag [#allocation3], %s252
        %s254 = sand.u32 %s50, 1
        %s255 = smul.addr %s254, 8
        %s256 = scalar_lea.vmem [#allocation2], %s255
        // Predicated region
        $region33: #{scaled_dot_product_attention.1} parent=31 // pred_check
          %p257 = pneg %p63
        $region34: #{scaled_dot_product_attention.1} parent=31 // pred_check_branch
          %259 = sbr.rel (%p257) target = $region36
        $region35: #{scaled_dot_product_attention.1} parent=31 // pred_region
          %260 = dma.done %s253, 128
        $region36: #{scaled_dot_product_attention.1} parent=31 // pred_fallthru
          _
        %s261 = sand.u32 %s28, 1
        %s262 = scalar_lea.sflag [#allocation6], %s261
        %s263 = sand.u32 %s76, 1
        %s264 = smul.addr %s263, 8
        %s265 = scalar_lea.vmem [#allocation5], %s264
        // Predicated region
        $region37: #{scaled_dot_product_attention.1} parent=31 // pred_check
          %p266 = pneg %p89
        $region38: #{scaled_dot_product_attention.1} parent=31 // pred_check_branch
          %268 = sbr.rel (%p266) target = $region40
        $region39: #{scaled_dot_product_attention.1} parent=31 // pred_region
          %269 = dma.done %s262, 128
        $region40: #{scaled_dot_product_attention.1} parent=31 // pred_fallthru
          _
        %s270 = sand.u32 %s28, 1
        %s271 = scalar_lea.sflag [#allocation6], %s270
        %s272 = sand.u32 %s102, 1
        %s273 = smul.addr %s272, 8
        %s274 = scalar_lea.vmem [#allocation7], %s273
        // Predicated region
        $region41: #{scaled_dot_product_attention.1} parent=31 // pred_check
          %p275 = pneg %p115
        $region42: #{scaled_dot_product_attention.1} parent=31 // pred_check_branch
          %277 = sbr.rel (%p275) target = $region44
        $region43: #{scaled_dot_product_attention.1} parent=31 // pred_region
          %278 = dma.done %s271, 128
        $region44: #{scaled_dot_product_attention.1} parent=31 // pred_fallthru
          _
        %s279 = sand.u32 %s50, 1
        %s280 = scalar_lea.sflag [#allocation3], %s279
        %s281 = sand.u32 %s50, 1
        %s282 = smul.addr %s281, 8
        %s283 = scalar_lea.vmem [#allocation2], %s282
        %p284 = pneg %p63
        %p285 = pneg %p60
        %s286 = sand.u32 %s28, 1
        %s287 = scalar_lea.sflag [#allocation6], %s286
        %s288 = sand.u32 %s76, 1
        %s289 = smul.addr %s288, 8
        %s290 = scalar_lea.vmem [#allocation5], %s289
        %p291 = pneg %p89
        %p292 = pneg %p86
        %s293 = sand.u32 %s28, 1
        %s294 = scalar_lea.sflag [#allocation6], %s293
        %s295 = sand.u32 %s102, 1
        %s296 = smul.addr %s295, 8
        %s297 = scalar_lea.vmem [#allocation7], %s296
        %p298 = pneg %p115
        %p299 = pneg %p112
        %p300 = pneg %p143
        %p301 = pneg %p140
        %s302 = sand.u32 %s130, 1
        %s303 = scalar_lea.sflag [#allocation4], %s302
        %s304 = sand.u32 %s130, 1
        %s305 = smul.addr %s304, 8
        %s306 = scalar_lea.vmem [#allocation8], %s305
        %p307 = pneg %p171
        %p308 = pneg %p168
        %s309 = sand.u32 %s158, 1
        %s310 = scalar_lea.sflag [#allocation10], %s309
        %s311 = sand.u32 %s158, 1
        %s312 = smul.addr %s311, 8
        %s313 = scalar_lea.vmem [#allocation9], %s312
        %v314 = vld [vmem:[%s256] sm:$0xff]
        %v315 = vld [vmem:[%s265] sm:$0xff]
        %v316 = vld [vmem:[%s274] sm:$0xff]
        %v317 = vmul.f32 %v314, 0.17677669
        %vm318 = vcmask 261120
        %v320 = vsel %vm318, %v317, 0
        %v323 = vsel %vm318, %v315, 0
        %325 = vmatprep.subr.mxu0 0.0
        %326 = vmatpush1.xpose.msra.mxu0 %v323
        %327 = vmatprep.subr.mxu0 0.0
        %328 = vmatpush1.xpose.msra.mxu0 0.0
        %329 = vmatprep.subr.mxu0 0.0
        %330 = vmatpush1.xpose.msra.mxu0 0.0
        %331 = vmatprep.subr.mxu0 0.0
        %332 = vmatpush1.xpose.msra.mxu0 0.0
        %333 = vmatprep.subr.mxu0 0.0
        %334 = vmatpush1.xpose.msra.mxu0 0.0
        %335 = vmatprep.subr.mxu0 0.0
        %336 = vmatpush1.xpose.msra.mxu0 0.0
        %337 = vmatprep.subr.mxu0 0.0
        %338 = vmatpush1.xpose.msra.mxu0 0.0
        %339 = vmatprep.subr.mxu0 0.0
        %340 = vmatpush1.xpose.msra.mxu0 0.0
        %341 = vmatprep.subr.mxu0 0.0
        %342 = vmatpush1.xpose.msra.mxu0 0.0
        %343 = vmatprep.subr.mxu0 0.0
        %344 = vmatpush1.xpose.msra.mxu0 0.0
        %345 = vmatprep.subr.mxu0 0.0
        %346 = vmatpush1.xpose.msra.mxu0 0.0
        %347 = vmatprep.subr.mxu0 0.0
        %348 = vmatpush1.xpose.msra.mxu0 0.0
        %349 = vmatprep.subr.mxu0 0.0
        %350 = vmatpush1.xpose.msra.mxu0 0.0
        %351 = vmatprep.subr.mxu0 0.0
        %352 = vmatpush1.xpose.msra.mxu0 0.0
        %353 = vmatprep.subr.mxu0 0.0
        %354 = vmatpush1.xpose.msra.mxu0 0.0
        %355 = vmatprep.subr.mxu0 0.0
        %356 = vmatpush1.xpose.msra.mxu0 0.0
        %357 = vmatprep.subr.mxu0 0.0
        %358 = vmatpush1.xpose.msra.mxu0 0.0
        %359 = vmatprep.subr.mxu0 0.0
        %360 = vmatpush1.xpose.msra.mxu0 0.0
        %361 = vmatprep.subr.mxu0 0.0
        %362 = vmatpush1.xpose.msra.mxu0 0.0
        %363 = vmatprep.subr.mxu0 0.0
        %364 = vmatpush1.xpose.msra.mxu0 0.0
        %365 = vmatprep.subr.mxu0 0.0
        %366 = vmatpush1.xpose.msra.mxu0 0.0
        %367 = vmatprep.subr.mxu0 0.0
        %368 = vmatpush1.xpose.msra.mxu0 0.0
        %369 = vmatprep.subr.mxu0 0.0
        %370 = vmatpush1.xpose.msra.mxu0 0.0
        %371 = vmatprep.subr.mxu0 0.0
        %372 = vmatpush1.xpose.msra.mxu0 0.0
        %373 = vmatprep.subr.mxu0 0.0
        %374 = vmatpush1.xpose.msra.mxu0 0.0
        %375 = vmatprep.subr.mxu0 0.0
        %376 = vmatpush1.xpose.msra.mxu0 0.0
        %377 = vmatprep.subr.mxu0 0.0
        %378 = vmatpush1.xpose.msra.mxu0 0.0
        %379 = vmatprep.subr.mxu0 0.0
        %380 = vmatpush1.xpose.msra.mxu0 0.0
        %381 = vmatprep.subr.mxu0 0.0
        %382 = vmatpush1.xpose.msra.mxu0 0.0
        %383 = vmatprep.subr.mxu0 0.0
        %384 = vmatpush1.xpose.msra.mxu0 0.0
        %385 = vmatprep.subr.mxu0 0.0
        %386 = vmatpush1.xpose.msra.mxu0 0.0
        %387 = vmatprep.subr.mxu0 0.0
        %388 = vmatpush1.xpose.msra.mxu0 0.0
        %389 = vmatprep.mubr.f32.mxu0 0.0
        %390 = vmatmul.mubr.f32.gmra.mrb[0].mxu0 %v320
        %v391 = vpop.f32.mrb[0].mxu0
        %v392 = vadd.f32 0.0, %v391
        %v393 = vpop.f32.mrb[0].mxu0
        %394 = vdwg.mxu0
        %vm395 = vcmask 64512
        %v396 = vsel %vm395, %v392, -inf
        %397 = vmax.xlane.f32.xlu0 %v396
        %v398 = vpop.xlane.xlu0 %397
        %v399 = vsub.f32 %v392, %v398
        %v400 = vmul.f32 %v399, 1.442695
        %v401 = vpow.pop %v400
        %v402 = vsel %vm395, %v401, 0.0
        %403 = vadd.xlane.f32.xlu0 %v402
        %v404 = vpop.xlane.xlu0 %403
        %v405 = vadd.f32 %v404, 1.0
        %v406 = vrcp.pop %v405
        %v407 = vmul.f32 %v401, %v406
        %408 = vst.msk [vmem:[%s313] sm:$0xff] %vm395, %v407
        %v410 = vsel %vm395, %v407, 0
        %412 = vmatprep.subr.mxu0 0.0
        %413 = vmatpush1.msra.mxu0 %v316
        %414 = vmatprep.subr.mxu0 0.0
        %415 = vmatpush1.msra.mxu0 0.0
        %416 = vmatprep.subr.mxu0 0.0
        %417 = vmatpush1.msra.mxu0 0.0
        %418 = vmatprep.subr.mxu0 0.0
        %419 = vmatpush1.msra.mxu0 0.0
        %420 = vmatprep.subr.mxu0 0.0
        %421 = vmatpush1.msra.mxu0 0.0
        %422 = vmatprep.subr.mxu0 0.0
        %423 = vmatpush1.msra.mxu0 0.0
        %424 = vmatprep.subr.mxu0 0.0
        %425 = vmatpush1.msra.mxu0 0.0
        %426 = vmatprep.subr.mxu0 0.0
        %427 = vmatpush1.msra.mxu0 0.0
        %428 = vmatprep.subr.mxu0 0.0
        %429 = vmatpush1.msra.mxu0 0.0
        %430 = vmatprep.subr.mxu0 0.0
        %431 = vmatpush1.msra.mxu0 0.0
        %432 = vmatprep.subr.mxu0 0.0
        %433 = vmatpush1.msra.mxu0 0.0
        %434 = vmatprep.subr.mxu0 0.0
        %435 = vmatpush1.msra.mxu0 0.0
        %436 = vmatprep.subr.mxu0 0.0
        %437 = vmatpush1.msra.mxu0 0.0
        %438 = vmatprep.subr.mxu0 0.0
        %439 = vmatpush1.msra.mxu0 0.0
        %440 = vmatprep.subr.mxu0 0.0
        %441 = vmatpush1.msra.mxu0 0.0
        %442 = vmatprep.subr.mxu0 0.0
        %443 = vmatpush1.msra.mxu0 0.0
        %444 = vmatprep.subr.mxu0 0.0
        %445 = vmatpush1.msra.mxu0 0.0
        %446 = vmatprep.subr.mxu0 0.0
        %447 = vmatpush1.msra.mxu0 0.0
        %448 = vmatprep.subr.mxu0 0.0
        %449 = vmatpush1.msra.mxu0 0.0
        %450 = vmatprep.subr.mxu0 0.0
        %451 = vmatpush1.msra.mxu0 0.0
        %452 = vmatprep.subr.mxu0 0.0
        %453 = vmatpush1.msra.mxu0 0.0
        %454 = vmatprep.subr.mxu0 0.0
        %455 = vmatpush1.msra.mxu0 0.0
        %456 = vmatprep.subr.mxu0 0.0
        %457 = vmatpush1.msra.mxu0 0.0
        %458 = vmatprep.subr.mxu0 0.0
        %459 = vmatpush1.msra.mxu0 0.0
        %460 = vmatprep.subr.mxu0 0.0
        %461 = vmatpush1.msra.mxu0 0.0
        %462 = vmatprep.subr.mxu0 0.0
        %463 = vmatpush1.msra.mxu0 0.0
        %464 = vmatprep.subr.mxu0 0.0
        %465 = vmatpush1.msra.mxu0 0.0
        %466 = vmatprep.subr.mxu0 0.0
        %467 = vmatpush1.msra.mxu0 0.0
        %468 = vmatprep.subr.mxu0 0.0
        %469 = vmatpush1.msra.mxu0 0.0
        %470 = vmatprep.subr.mxu0 0.0
        %471 = vmatpush1.msra.mxu0 0.0
        %472 = vmatprep.subr.mxu0 0.0
        %473 = vmatpush1.msra.mxu0 0.0
        %474 = vmatprep.subr.mxu0 0.0
        %475 = vmatpush1.msra.mxu0 0.0
        %476 = vmatprep.mubr.f32.mxu0 0.0
        %477 = vmatmul.mubr.f32.gmra.mrb[0].mxu0 %v410
        %v478 = vpop.f32.mrb[0].mxu0
        %v479 = vadd.f32 0.0, %v478
        %v480 = vpop.f32.mrb[0].mxu0
        %481 = vdwg.mxu0
        %482 = vst.msk [vmem:[%s306] sm:$0xff] %vm318, %v479
        %s483 = sand.u32 %s130, 1
        %s484 = scalar_lea.sflag [#allocation4], %s483
        %s485 = sand.u32 %s130, 1
        %s486 = smul.addr %s485, 8
        %s487 = scalar_lea.vmem [#allocation8], %s486
        %s488 = sand.u32 %s158, 1
        %s489 = scalar_lea.sflag [#allocation10], %s488
        %s490 = sand.u32 %s158, 1
        %s491 = smul.addr %s490, 8
        %s492 = scalar_lea.vmem [#allocation9], %s491
        // Predicated region
        $region45: #{scaled_dot_product_attention.1} parent=31 // pred_check
          %p493 = pneg %p140
        $region46: #{scaled_dot_product_attention.1} parent=31 // pred_check_branch
          %495 = sbr.rel (%p493) target = $region48
        $region47: #{scaled_dot_product_attention.1} parent=31 // pred_region
          %s497 = ssub.s32 128, 128
          %498 = vsyncadd %s484, %s497
          %s499 = sadd.s32 %s33, %s32
          %s500 = smul.addr %s499, 128
          %s501 = scalar_lea.hbm %s3, %s500
          %s503 = sshll.u32 %s487, 4
          %s504 = int_to_ptr.vmem [resolvable:$true] %s503
          %506 = dma.vmem_to_hbm [thread:$0]  %s504, 128, %s501, %s484
        $region48: #{scaled_dot_product_attention.1} parent=31 // pred_fallthru
          _
        // Predicated region
        $region49: #{scaled_dot_product_attention.1} parent=31 // pred_check
          %p507 = pneg %p168
        $region50: #{scaled_dot_product_attention.1} parent=31 // pred_check_branch
          %509 = sbr.rel (%p507) target = $region52
        $region51: #{scaled_dot_product_attention.1} parent=31 // pred_region
          %s511 = ssub.s32 128, 128
          %512 = vsyncadd %s489, %s511
          %s513 = sadd.s32 %s33, %s32
          %s514 = smul.addr %s513, 128
          %s515 = scalar_lea.hbm %s4, %s514
          %s517 = sshll.u32 %s492, 4
          %s518 = int_to_ptr.vmem [resolvable:$true] %s517
          %520 = dma.vmem_to_hbm [thread:$0]  %s518, 128, %s515, %s489
        $region52: #{scaled_dot_product_attention.1} parent=31 // pred_fallthru
          _
      $region32: #{scaled_dot_product_attention.1} parent=5 // pred_fallthru
        _
      %p521 = scmp.le.s32.totalorder 2, %s23
      // Predicated region
      $region53: #{scaled_dot_product_attention.1} parent=5 // pred_check
        %p522 = pneg %p521
      $region54: #{scaled_dot_product_attention.1} parent=5 // pred_check_branch
        %524 = sbr.rel (%p522) target = $region56
      $region55: #{scaled_dot_product_attention.1} parent=5 // pred_region
        %s525 = ssub.s32 %s23, 2
        // Predicated region
        $region57: #{scaled_dot_product_attention.1} parent=55 // pred_check
          %p526 = pneg %p146
        $region58: #{scaled_dot_product_attention.1} parent=55 // pred_check_branch
          %528 = sbr.rel (%p526) target = $region60
        $region59: #{scaled_dot_product_attention.1} parent=55 // pred_region
          %s529 = sand.u32 %s131, 1
          %s530 = scalar_lea.sflag [#allocation4], %s529
          %s531 = sand.u32 %s131, 1
          %s532 = smul.addr %s531, 8
          %s533 = scalar_lea.vmem [#allocation8], %s532
          %534 = dma.done %s530, 128
        $region60: #{scaled_dot_product_attention.1} parent=55 // pred_fallthru
          _
        // Predicated region
        $region61: #{scaled_dot_product_attention.1} parent=55 // pred_check
          %p535 = pneg %p174
        $region62: #{scaled_dot_product_attention.1} parent=55 // pred_check_branch
          %537 = sbr.rel (%p535) target = $region64
        $region63: #{scaled_dot_product_attention.1} parent=55 // pred_region
          %s538 = sand.u32 %s159, 1
          %s539 = scalar_lea.sflag [#allocation10], %s538
          %s540 = sand.u32 %s159, 1
          %s541 = smul.addr %s540, 8
          %s542 = scalar_lea.vmem [#allocation9], %s541
          %543 = dma.done %s539, 128
        $region64: #{scaled_dot_product_attention.1} parent=55 // pred_fallthru
          _
      $region56: #{scaled_dot_product_attention.1} parent=5 // pred_fallthru
        _
    $region6: #{scaled_dot_product_attention.1} parent=1 // loop_footer
      %s27 = sadd.s32 1, %s23
    $region7: #{scaled_dot_product_attention.1} parent=1 // loop_footer_branch
      %22 = sbr.rel target = $region3
    $region8: #{scaled_dot_product_attention.1} parent=1 // loop_exit
      _
    %544 = vsyncpa [#allocation3], 1
    %s545 = scalar_lea.sflag [#allocation3], 1
    %546 = vsyncpa %s545, 1
    %547 = vsyncpa [#allocation6], 1
    %s548 = scalar_lea.sflag [#allocation6], 1
    %549 = vsyncpa %s548, 1
    %550 = vsyncpa [#allocation4], 1
    %s551 = scalar_lea.sflag [#allocation4], 1
    %552 = vsyncpa %s551, 1
    %553 = vsyncpa [#allocation10], 1
    %s554 = scalar_lea.sflag [#allocation10], 1
    %555 = vsyncpa %s554, 1

</llo_original>
